<compile_context>
chip_gen: v5e
topology: v5e:2x2
jax: 0.10.0
libtpu: 0.0.40
codegen_flags: <defaults>
</compile_context>

<pallas_src>
from functools import partial

import jax
import jax.numpy as jnp
from jax.experimental import pallas as pl
from jax.experimental.pallas import tpu as pltpu


# ---------------------------------------------------------------------------
# VMEM budgeting
# ---------------------------------------------------------------------------
def _vmem_caps():
    """(explicit vmem_limit_bytes, usable tile budget) for the current chip."""
    cap = 64 * 1024 * 1024  # conservative fallback = v7x physical VMEM
    try:
        cap = int(pltpu.get_tpu_info().vmem_capacity_bytes)
    except Exception:
        pass
    # v7x (64 MiB phys) -> 48 MiB limit; v5e/v6e (128 MiB phys) -> 96 MiB limit.
    limit = min((cap * 3) // 4, 96 * 1024 * 1024)
    # Leave headroom for compiler scratch, semaphores and in-kernel temporaries.
    budget = max(limit - 8 * 1024 * 1024, 8 * 1024 * 1024)
    return limit, budget


def _pick_tile(hw, c, itemsize, budget_bytes, n_buffers, max_tile=None,
               max_lanes=8192):
    """Spatial tile T: either the full extent HW (single full-dim block) or the
    largest multiple of 128 such that n_buffers (C, T) tiles fit the budget."""
    c_pad = -(-c // 8) * 8
    hw_pad = -(-hw // 128) * 128
    t_budget = max(128, (budget_bytes // (n_buffers * c_pad * itemsize)) // 128 * 128)
    t = min(hw_pad, t_budget, max_lanes)
    if max_tile is not None:
        t = min(t, max(128, max_tile // 128 * 128))
    if t >= hw_pad:
        return hw  # one tile covers everything -> use the full (legal) extent
    return t


def _fused_estimate(c, hw, itemsize):
    """Rough VMEM bytes for the fused path: x (2 bufs) + 2 outputs (2 bufs each)
    + one f32 temp for the pooled-sum cast + one tile-sized o1 temporary."""
    c_pad = -(-c // 8) * 8
    hw_pad = -(-hw // 128) * 128
    slab = c_pad * hw_pad * itemsize
    return 7 * slab + c_pad * hw_pad * 4


# ---------------------------------------------------------------------------
# Fused single-pass kernel: squeeze + SE MLP + excite, one batch per step.
# ---------------------------------------------------------------------------
def _make_fused_kernel(hw):
    inv_hw = 1.0 / hw

    def kernel(x_ref, w1t_ref, b1_ref, w2_ref, b2_ref, o1_ref, o2_ref):
        xb = x_ref[0]                                              # (C, HW) native
        # Global average pool (reduction is masked to the logical HW extent).
        p = jnp.sum(xb.astype(jnp.float32), axis=-1, keepdims=True) * inv_hw  # (C,1)
        # Tiny MLP via broadcast-multiply-reduce (VPU/XLU only, no MXU).
        h = jnp.maximum(
            jnp.sum(w1t_ref[...] * p, axis=0, keepdims=True) + b1_ref[...], 0.0)  # (1,hid)
        g = jax.nn.sigmoid(
            jnp.sum(w2_ref[...] * h, axis=-1, keepdims=True) + b2_ref[...])       # (C,1)
        gx = g.astype(xb.dtype)
        o1 = xb * gx
        o1_ref[0] = o1
        o2_ref[0] = xb - o1                                        # o1 + o2 == x exactly

    return kernel


# ---------------------------------------------------------------------------
# Two-pass fallback: pass 1 (squeeze) and pass 2 (excite).
# ---------------------------------------------------------------------------
def _make_squeeze_kernel(T, HW, n_s):
    needs_mask = (n_s * T) > HW  # last tile extends past HW

    def kernel(x_ref, sum_ref, acc_ref):
        s = pl.program_id(1)
        xb = x_ref[0]                                              # (C, T) native

        if n_s == 1:
            # Single full-extent tile (T == HW): logical-shape-masked reduce.
            sum_ref[0] = jnp.sum(xb.astype(jnp.float32), axis=-1, keepdims=True)
            return

        @pl.when(s == 0)
        def _():
            acc_ref[...] = jnp.zeros_like(acc_ref)

        # Lane-wise accumulation into a (C, 128) f32 running sum: pure VPU adds
        # per 128-lane chunk; the single cross-lane (XLU) reduce + (C,1) write
        # happens once per batch at the last spatial step.
        acc = acc_ref[...]
        if needs_mask:
            lane = jax.lax.broadcasted_iota(jnp.int32, (xb.shape[0], 128), 1)
            base = s * T
        for k in range(T // 128):
            chunk = xb[:, k * 128:(k + 1) * 128].astype(jnp.float32)
            if needs_mask:
                chunk = jnp.where(base + k * 128 + lane < HW, chunk, 0.0)
            acc = acc + chunk
        acc_ref[...] = acc

        @pl.when(s == n_s - 1)
        def _():
            sum_ref[0] = jnp.sum(acc_ref[...], axis=-1, keepdims=True)

    return kernel


def _excite_kernel(x_ref, g_ref, o1_ref, o2_ref):
    # g is pre-cast to x.dtype in the wrapper; one multiply + one subtract per
    # tile, no casts, no (1 - g) broadcast.  Partial last block: Pallas masks
    # the out-of-range lanes on store.
    xb = x_ref[0]                                                  # (C, T)
    o1 = xb * g_ref[0]
    o1_ref[0] = o1
    o2_ref[0] = xb - o1


# ---------------------------------------------------------------------------
# Wrapper
# ---------------------------------------------------------------------------
@partial(jax.jit, static_argnames=("force_two_pass", "max_tile"))
def gabgate_pallas(x, w1, b1, w2, b2, force_two_pass=False, max_tile=None):
    """x: (B, C, H, W); w1: (hid, C); b1: (hid,); w2: (C, hid); b2: (C,)."""
    B, C, H, W = x.shape
    HW = H * W
    hid = w1.shape[0]
    itemsize = x.dtype.itemsize

    x2 = x.reshape(B, C, HW)
    vmem_limit, budget = _vmem_caps()

    use_fused = (not force_two_pass) and (_fused_estimate(C, HW, itemsize) <= budget)

    if use_fused:
        o1, o2 = pl.pallas_call(
            _make_fused_kernel(HW),
            out_shape=(jax.ShapeDtypeStruct((B, C, HW), x.dtype),
                       jax.ShapeDtypeStruct((B, C, HW), x.dtype)),
            grid_spec=pltpu.PrefetchScalarGridSpec(
                num_scalar_prefetch=0,
                grid=(B,),
                in_specs=[
                    pl.BlockSpec((1, C, HW), lambda b: (b, 0, 0)),
                    pl.BlockSpec((C, hid), lambda b: (0, 0)),   # w1.T
                    pl.BlockSpec((1, hid), lambda b: (0, 0)),   # b1 row
                    pl.BlockSpec((C, hid), lambda b: (0, 0)),   # w2
                    pl.BlockSpec((C, 1), lambda b: (0, 0)),     # b2 col
                ],
                out_specs=[
                    pl.BlockSpec((1, C, HW), lambda b: (b, 0, 0)),
                    pl.BlockSpec((1, C, HW), lambda b: (b, 0, 0)),
                ],
            ),
            compiler_params=pltpu.CompilerParams(
                dimension_semantics=("parallel",),
                vmem_limit_bytes=vmem_limit),
        )(x2,
          w1.astype(jnp.float32).T,
          b1.astype(jnp.float32).reshape(1, hid),
          w2.astype(jnp.float32),
          b2.astype(jnp.float32).reshape(C, 1))
        return o1.reshape(B, C, H, W), o2.reshape(B, C, H, W)

    # ---------------- two-pass fallback ----------------
    # Pass 1: squeeze (only x is double-buffered -> small divisor).
    T1 = _pick_tile(HW, C, itemsize, budget, n_buffers=3, max_tile=max_tile)
    n_s1 = pl.cdiv(HW, T1)
    sums = pl.pallas_call(
        _make_squeeze_kernel(T1, HW, n_s1),
        out_shape=jax.ShapeDtypeStruct((B, C, 1), jnp.float32),
        grid_spec=pltpu.PrefetchScalarGridSpec(
            num_scalar_prefetch=0,
            grid=(B, n_s1),
            in_specs=[pl.BlockSpec((1, C, T1), lambda b, s: (b, 0, s))],
            out_specs=pl.BlockSpec((1, C, 1), lambda b, s: (b, 0, 0)),
            scratch_shapes=[pltpu.VMEM((C, 128), jnp.float32)],
        ),
        compiler_params=pltpu.CompilerParams(
            dimension_semantics=("parallel", "arbitrary"),
            vmem_limit_bytes=vmem_limit),
    )(x2)

    # Tiny SE MLP over all batches at once (negligible compute -> plain XLA).
    pooled = sums[:, :, 0] * (1.0 / HW)                                     # (B, C)
    h = jnp.maximum(pooled @ w1.astype(jnp.float32).T
                    + b1.astype(jnp.float32)[None, :], 0.0)                 # (B, hid)
    g = jax.nn.sigmoid(h @ w2.astype(jnp.float32).T
                       + b2.astype(jnp.float32)[None, :])                   # (B, C)
    g = g.astype(x.dtype).reshape(B, C, 1)

    # Pass 2: excite (x + two outputs, each double-buffered -> divisor 6).
    T2 = _pick_tile(HW, C, itemsize, budget, n_buffers=6, max_tile=max_tile)
    n_s2 = pl.cdiv(HW, T2)
    o1, o2 = pl.pallas_call(
        _excite_kernel,
        out_shape=(jax.ShapeDtypeStruct((B, C, HW), x.dtype),
                   jax.ShapeDtypeStruct((B, C, HW), x.dtype)),
        grid_spec=pltpu.PrefetchScalarGridSpec(
            num_scalar_prefetch=0,
            grid=(B, n_s2),
            in_specs=[
                pl.BlockSpec((1, C, T2), lambda b, s: (b, 0, s)),
                pl.BlockSpec((1, C, 1), lambda b, s: (b, 0, 0)),
            ],
            out_specs=[
                pl.BlockSpec((1, C, T2), lambda b, s: (b, 0, s)),
                pl.BlockSpec((1, C, T2), lambda b, s: (b, 0, s)),
            ],
        ),
        compiler_params=pltpu.CompilerParams(
            dimension_semantics=("parallel", "parallel"),
            vmem_limit_bytes=vmem_limit),
    )(x2, g)
    return o1.reshape(B, C, H, W), o2.reshape(B, C, H, W)


# ---------------------------------------------------------------------------
# Pure-JAX reference (matches the PyTorch module's forward).
# ---------------------------------------------------------------------------
def gabgate_ref(x, w1, b1, w2, b2):
    z = jnp.mean(x, axis=(2, 3))                                   # (B, C)
    h = jnp.maximum(z @ w1.T + b1[None, :], 0.0)                   # (B, hid)
    g = jax.nn.sigmoid(h @ w2.T + b2[None, :])                     # (B, C)
    g = g[:, :, None, None]
    return x * g, x * (1.0 - g)


if __name__ == "__main__":
    B, C, H, W = 2, 8, 16, 16
    reduction = 4
    hid = C // reduction

    key = jax.random.PRNGKey(0)
    kx, k1, k2, k3, k4, kx2 = jax.random.split(key, 6)

    # 1x1 conv weights flattened to matmul form (out_ch, in_ch) + 1-D biases.
    w1 = jax.random.normal(k1, (hid, C), dtype=jnp.float32) * 0.5
    b1 = jax.random.normal(k2, (hid,), dtype=jnp.float32) * 0.1
    w2 = jax.random.normal(k3, (C, hid), dtype=jnp.float32) * 0.5
    b2 = jax.random.normal(k4, (C,), dtype=jnp.float32) * 0.1

    def check(xv, **kw):
        o1, o2 = gabgate_pallas(xv, w1, b1, w2, b2, **kw)
        jax.block_until_ready((o1, o2))
        r1, r2 = gabgate_ref(xv, w1, b1, w2, b2)
        assert jnp.allclose(o1, r1, atol=1e-5, rtol=1e-5), "o1 mismatch"
        assert jnp.allclose(o2, r2, atol=1e-5, rtol=1e-5), "o2 mismatch"

    x = jax.random.normal(kx, (B, C, H, W), dtype=jnp.float32)
    check(x)                                          # fused single-pass path
    check(x, force_two_pass=True, max_tile=128)       # two-pass, multi-tile squeeze
    x_odd = jax.random.normal(kx2, (B, C, 18, 18), dtype=jnp.float32)
    check(x_odd)                                      # fused, HW not a 128 multiple
    check(x_odd, force_two_pass=True, max_tile=128)   # two-pass, masked tail tile

    print("KERNEL_OK")
</pallas_src>

<mosaic_0001>
module attributes {stable_mosaic.version = 11 : i64} {
  func.func @kernel(%arg0: i32, %arg1: memref<1x8x256xf32, #tpu.memory_space<vmem>>, %arg2: memref<8x2xf32, #tpu.memory_space<vmem>>, %arg3: memref<1x2xf32, #tpu.memory_space<vmem>>, %arg4: memref<8x2xf32, #tpu.memory_space<vmem>>, %arg5: memref<8x1xf32, #tpu.memory_space<vmem>>, %arg6: memref<1x8x256xf32, #tpu.memory_space<vmem>>, %arg7: memref<1x8x256xf32, #tpu.memory_space<vmem>>) attributes {dimension_semantics = [#tpu.dimension_semantics<parallel>], iteration_bounds = array<i64: 2>, scalar_prefetch = 0 : i64, scratch_operands = 0 : i64, tpu.core_type = #tpu.core_type<tc>, window_params = [{transform_indices = @transform_0, window_bounds = array<i64: 1, 8, 256>}, {pipeline_mode = #tpu.pipeline_mode<synchronous>, transform_indices = @transform_1, window_bounds = array<i64: 8, 2>}, {pipeline_mode = #tpu.pipeline_mode<synchronous>, transform_indices = @transform_2, window_bounds = array<i64: 1, 2>}, {pipeline_mode = #tpu.pipeline_mode<synchronous>, transform_indices = @transform_3, window_bounds = array<i64: 8, 2>}, {pipeline_mode = #tpu.pipeline_mode<synchronous>, transform_indices = @transform_4, window_bounds = array<i64: 8, 1>}, {transform_indices = @transform_5, window_bounds = array<i64: 1, 8, 256>}, {transform_indices = @transform_6, window_bounds = array<i64: 1, 8, 256>}]} {
    %c0 = arith.constant 0 : index
    %c0_0 = arith.constant 0 : index
    %c0_1 = arith.constant 0 : index
    %0 = vector.load %arg1[%c0, %c0_0, %c0_1] : memref<1x8x256xf32, #tpu.memory_space<vmem>>, vector<1x8x256xf32>
    %1 = vector.shape_cast %0 : vector<1x8x256xf32> to vector<8x256xf32>
    %cst = arith.constant dense<0.000000e+00> : vector<8xf32>
    %2 = vector.multi_reduction <add>, %1, %cst [1] : vector<8x256xf32> to vector<8xf32>
    %3 = vector.shape_cast %2 : vector<8xf32> to vector<8x1xf32>
    %cst_2 = arith.constant 3.906250e-03 : f32
    %4 = vector.broadcast %cst_2 : f32 to vector<8x1xf32>
    %5 = arith.mulf %3, %4 : vector<8x1xf32>
    %c0_3 = arith.constant 0 : index
    %c0_4 = arith.constant 0 : index
    %6 = vector.load %arg2[%c0_3, %c0_4] : memref<8x2xf32, #tpu.memory_space<vmem>>, vector<8x2xf32>
    %7 = vector.broadcast %5 : vector<8x1xf32> to vector<8x2xf32>
    %8 = arith.mulf %6, %7 : vector<8x2xf32>
    %cst_5 = arith.constant dense<0.000000e+00> : vector<2xf32>
    %9 = vector.multi_reduction <add>, %8, %cst_5 [0] : vector<8x2xf32> to vector<2xf32>
    %10 = vector.shape_cast %9 : vector<2xf32> to vector<1x2xf32>
    %c0_6 = arith.constant 0 : index
    %c0_7 = arith.constant 0 : index
    %11 = vector.load %arg3[%c0_6, %c0_7] : memref<1x2xf32, #tpu.memory_space<vmem>>, vector<1x2xf32>
    %12 = arith.addf %10, %11 : vector<1x2xf32>
    %cst_8 = arith.constant 0.000000e+00 : f32
    %13 = vector.broadcast %cst_8 : f32 to vector<1x2xf32>
    %14 = arith.maximumf %12, %13 : vector<1x2xf32>
    %c0_9 = arith.constant 0 : index
    %c0_10 = arith.constant 0 : index
    %15 = vector.load %arg4[%c0_9, %c0_10] : memref<8x2xf32, #tpu.memory_space<vmem>>, vector<8x2xf32>
    %16 = vector.broadcast %14 : vector<1x2xf32> to vector<8x2xf32>
    %17 = arith.mulf %15, %16 : vector<8x2xf32>
    %cst_11 = arith.constant dense<0.000000e+00> : vector<8xf32>
    %18 = vector.multi_reduction <add>, %17, %cst_11 [1] : vector<8x2xf32> to vector<8xf32>
    %19 = vector.shape_cast %18 : vector<8xf32> to vector<8x1xf32>
    %c0_12 = arith.constant 0 : index
    %c0_13 = arith.constant 0 : index
    %20 = vector.load %arg5[%c0_12, %c0_13] : memref<8x1xf32, #tpu.memory_space<vmem>>, vector<8x1xf32>
    %21 = arith.addf %19, %20 : vector<8x1xf32>
    %22 = arith.negf %21 : vector<8x1xf32>
    %23 = math.exp %22 : vector<8x1xf32>
    %cst_14 = arith.constant 1.000000e+00 : f32
    %24 = vector.broadcast %cst_14 : f32 to vector<8x1xf32>
    %25 = arith.addf %24, %23 : vector<8x1xf32>
    %26 = arith.divf %24, %25 : vector<8x1xf32>
    %27 = vector.broadcast %26 : vector<8x1xf32> to vector<8x256xf32>
    %28 = arith.mulf %1, %27 : vector<8x256xf32>
    %c0_15 = arith.constant 0 : index
    %c0_16 = arith.constant 0 : index
    %c0_17 = arith.constant 0 : index
    %29 = vector.load %arg6[%c0_15, %c0_16, %c0_17] : memref<1x8x256xf32, #tpu.memory_space<vmem>>, vector<1x8x256xf32>
    %30 = vector.shape_cast %29 : vector<1x8x256xf32> to vector<8x256xf32>
    %31 = vector.shape_cast %28 : vector<8x256xf32> to vector<1x8x256xf32>
    tpu.vector_store %arg6[%c0_15, %c0_16, %c0_17], %31 {strides = array<i32>} : memref<1x8x256xf32, #tpu.memory_space<vmem>>, vector<1x8x256xf32>,
    %32 = arith.subf %1, %28 : vector<8x256xf32>
    %c0_18 = arith.constant 0 : index
    %c0_19 = arith.constant 0 : index
    %c0_20 = arith.constant 0 : index
    %33 = vector.load %arg7[%c0_18, %c0_19, %c0_20] : memref<1x8x256xf32, #tpu.memory_space<vmem>>, vector<1x8x256xf32>
    %34 = vector.shape_cast %33 : vector<1x8x256xf32> to vector<8x256xf32>
    %35 = vector.shape_cast %32 : vector<8x256xf32> to vector<1x8x256xf32>
    tpu.vector_store %arg7[%c0_18, %c0_19, %c0_20], %35 {strides = array<i32>} : memref<1x8x256xf32, #tpu.memory_space<vmem>>, vector<1x8x256xf32>,
    return
  }
  func.func @transform_0(%arg0: i32) -> (i32, i32, i32) {
    %c0_i32 = arith.constant 0 : i32
    %c0_i32_0 = arith.constant 0 : i32
    %c0_i32_1 = arith.constant 0 : i32
    return %arg0, %c0_i32, %c0_i32_0 : i32, i32, i32
  }
  func.func @transform_1(%arg0: i32) -> (i32, i32) {
    %c0_i32 = arith.constant 0 : i32
    %c0_i32_0 = arith.constant 0 : i32
    %c0_i32_1 = arith.constant 0 : i32
    return %c0_i32, %c0_i32_0 : i32, i32
  }
  func.func @transform_2(%arg0: i32) -> (i32, i32) {
    %c0_i32 = arith.constant 0 : i32
    %c0_i32_0 = arith.constant 0 : i32
    %c0_i32_1 = arith.constant 0 : i32
    return %c0_i32, %c0_i32_0 : i32, i32
  }
  func.func @transform_3(%arg0: i32) -> (i32, i32) {
    %c0_i32 = arith.constant 0 : i32
    %c0_i32_0 = arith.constant 0 : i32
    %c0_i32_1 = arith.constant 0 : i32
    return %c0_i32, %c0_i32_0 : i32, i32
  }
  func.func @transform_4(%arg0: i32) -> (i32, i32) {
    %c0_i32 = arith.constant 0 : i32
    %c0_i32_0 = arith.constant 0 : i32
    %c0_i32_1 = arith.constant 0 : i32
    return %c0_i32, %c0_i32_0 : i32, i32
  }
  func.func @transform_5(%arg0: i32) -> (i32, i32, i32) {
    %c0_i32 = arith.constant 0 : i32
    %c0_i32_0 = arith.constant 0 : i32
    %c0_i32_1 = arith.constant 0 : i32
    return %arg0, %c0_i32, %c0_i32_0 : i32, i32, i32
  }
  func.func @transform_6(%arg0: i32) -> (i32, i32, i32) {
    %c0_i32 = arith.constant 0 : i32
    %c0_i32_0 = arith.constant 0 : i32
    %c0_i32_1 = arith.constant 0 : i32
    return %arg0, %c0_i32, %c0_i32_0 : i32, i32, i32
  }
}

</mosaic_0001>

<llo_original>
// kernel: gabgate_pallas.1
$region0: #{gabgate_pallas.1}
  #allocation0 [shape = 'u32[]', space=smem, size = 0x4, offset = 0x4, fixed_abs, tag = 'smem constant byte address 0x4 - core index']
  #allocation1 [shape = 'u32[72,128]{1,0:T(1,128)}', space=vmem, size = 0x9000, scoped, tag = 'internal scratch']
  %s0 = inlined_call_operand.vmem [shape: f32[2,8,256], index: 0, kind: input, shape index: {}]
  %s1 = inlined_call_operand.vmem [shape: f32[8,2], index: 1, kind: input, shape index: {}]
  %s2 = inlined_call_operand.vmem [shape: f32[1,2], index: 2, kind: input, shape index: {}]
  %s3 = inlined_call_operand.vmem [shape: f32[8,2], index: 3, kind: input, shape index: {}]
  %s4 = inlined_call_operand.vmem [shape: f32[8,1], index: 4, kind: input, shape index: {}]
  %s5 = inlined_call_operand.vmem [shape: f32[2,8,256], index: 5, kind: output, shape index: {0}]
  %s6 = inlined_call_operand.vmem [shape: f32[2,8,256], index: 6, kind: output, shape index: {1}]
  %7 = xla_tuple %s5, %s6
  %s8 = sld [smem:[#allocation0]]
  $region61: #{gabgate_pallas.1} parent=0
    _
  %s10 = ssub.s32 1, %s8
  %s11 = scalar_select 0, %s10, %s8
  loop: start=0, step=1, limit=4
  $region2: #{gabgate_pallas.1} parent=0 // loop_pre_header
    _
  $region3: #{gabgate_pallas.1} parent=0 // loop_header
    %s13 = sphi 0, %s17
    %p14 = scmp.ge.s32.totalorder %s13, 4
    %s23 = sphi 0, %s25
    %s26 = sphi 0, %s23
    %s27 = sphi 0, %s26
    %s43 = sphi 0, %s27
    %s47 = sphi 0, %s47
    %s49 = sphi 0, %s47
    %s50 = sphi 0, %s49
    %s64 = sphi 0, %s50
    %s68 = sphi 0, %s68
    %s70 = sphi 0, %s68
    %s71 = sphi 0, %s70
    %s85 = sphi 0, %s71
    %s89 = sphi 0, %s89
    %s91 = sphi 0, %s89
    %s92 = sphi 0, %s91
    %s106 = sphi 0, %s92
    %s110 = sphi 0, %s110
    %s112 = sphi 0, %s110
    %s113 = sphi 0, %s112
    %s127 = sphi 0, %s113
    %s133 = sphi 0, %s135
    %s136 = sphi 0, %s133
    %s137 = sphi 0, %s136
    %s153 = sphi 0, %s137
    %s159 = sphi 0, %s161
    %s162 = sphi 0, %s159
    %s163 = sphi 0, %s162
    %s179 = sphi 0, %s163
  $region4: #{gabgate_pallas.1} parent=0 // loop_header_branch
    %16 = sbr.rel (%p14) target = $region8
  $region5: #{gabgate_pallas.1} parent=0 // loop_body
    %s18 = ssub.s32 %s13, 1
    %s19 = ssub.s32 %s13, 2
    %s20 = sadd.s32 %s13, 1
    %s21 = ssub.s32 %s13, %s20
    %p22 = scmp.eq.s32.totalorder %s21, 0
    %s24 = sadd.s32 %s23, 1
    %s25 = scalar_select %p22, %s23, %s24
    %p28 = pneg %p22
    %p29 = scmp.eq.s32.totalorder %s13, 1
    %p30 = por %p28, %p29
    %p31 = scmp.ne.s32.totalorder %s23, %s26
    %p32 = scmp.eq.s32.totalorder %s13, 0
    %p33 = por %p31, %p32
    %p34 = scmp.ne.s32.totalorder %s23, %s26
    %p35 = scmp.eq.s32.totalorder %s18, 1
    %p36 = por %p34, %p35
    %p37 = scmp.ne.s32.totalorder %s26, %s27
    %p38 = scmp.eq.s32.totalorder %s18, 0
    %p39 = por %p37, %p38
    %p40 = scmp.ne.s32.totalorder %s26, %s27
    %p41 = scmp.eq.s32.totalorder %s19, 1
    %p42 = por %p40, %p41
    %p44 = scmp.ne.s32.totalorder %s27, %s43
    %p45 = scmp.eq.s32.totalorder %s19, 0
    %p46 = por %p44, %p45
    %s48 = sadd.s32 %s47, 1
    %p51 = scmp.eq.s32.totalorder %s13, 1
    %p52 = scmp.ne.s32.totalorder %s47, %s49
    %p53 = scmp.eq.s32.totalorder %s13, 0
    %p54 = por %p52, %p53
    %p55 = scmp.ne.s32.totalorder %s47, %s49
    %p56 = scmp.eq.s32.totalorder %s18, 1
    %p57 = por %p55, %p56
    %p58 = scmp.ne.s32.totalorder %s49, %s50
    %p59 = scmp.eq.s32.totalorder %s18, 0
    %p60 = por %p58, %p59
    %p61 = scmp.ne.s32.totalorder %s49, %s50
    %p62 = scmp.eq.s32.totalorder %s19, 1
    %p63 = por %p61, %p62
    %p65 = scmp.ne.s32.totalorder %s50, %s64
    %p66 = scmp.eq.s32.totalorder %s19, 0
    %p67 = por %p65, %p66
    %s69 = sadd.s32 %s68, 1
    %p72 = scmp.eq.s32.totalorder %s13, 1
    %p73 = scmp.ne.s32.totalorder %s68, %s70
    %p74 = scmp.eq.s32.totalorder %s13, 0
    %p75 = por %p73, %p74
    %p76 = scmp.ne.s32.totalorder %s68, %s70
    %p77 = scmp.eq.s32.totalorder %s18, 1
    %p78 = por %p76, %p77
    %p79 = scmp.ne.s32.totalorder %s70, %s71
    %p80 = scmp.eq.s32.totalorder %s18, 0
    %p81 = por %p79, %p80
    %p82 = scmp.ne.s32.totalorder %s70, %s71
    %p83 = scmp.eq.s32.totalorder %s19, 1
    %p84 = por %p82, %p83
    %p86 = scmp.ne.s32.totalorder %s71, %s85
    %p87 = scmp.eq.s32.totalorder %s19, 0
    %p88 = por %p86, %p87
    %s90 = sadd.s32 %s89, 1
    %p93 = scmp.eq.s32.totalorder %s13, 1
    %p94 = scmp.ne.s32.totalorder %s89, %s91
    %p95 = scmp.eq.s32.totalorder %s13, 0
    %p96 = por %p94, %p95
    %p97 = scmp.ne.s32.totalorder %s89, %s91
    %p98 = scmp.eq.s32.totalorder %s18, 1
    %p99 = por %p97, %p98
    %p100 = scmp.ne.s32.totalorder %s91, %s92
    %p101 = scmp.eq.s32.totalorder %s18, 0
    %p102 = por %p100, %p101
    %p103 = scmp.ne.s32.totalorder %s91, %s92
    %p104 = scmp.eq.s32.totalorder %s19, 1
    %p105 = por %p103, %p104
    %p107 = scmp.ne.s32.totalorder %s92, %s106
    %p108 = scmp.eq.s32.totalorder %s19, 0
    %p109 = por %p107, %p108
    %s111 = sadd.s32 %s110, 1
    %p114 = scmp.eq.s32.totalorder %s13, 1
    %p115 = scmp.ne.s32.totalorder %s110, %s112
    %p116 = scmp.eq.s32.totalorder %s13, 0
    %p117 = por %p115, %p116
    %p118 = scmp.ne.s32.totalorder %s110, %s112
    %p119 = scmp.eq.s32.totalorder %s18, 1
    %p120 = por %p118, %p119
    %p121 = scmp.ne.s32.totalorder %s112, %s113
    %p122 = scmp.eq.s32.totalorder %s18, 0
    %p123 = por %p121, %p122
    %p124 = scmp.ne.s32.totalorder %s112, %s113
    %p125 = scmp.eq.s32.totalorder %s19, 1
    %p126 = por %p124, %p125
    %p128 = scmp.ne.s32.totalorder %s113, %s127
    %p129 = scmp.eq.s32.totalorder %s19, 0
    %p130 = por %p128, %p129
    %s131 = ssub.s32 %s13, %s20
    %p132 = scmp.eq.s32.totalorder %s131, 0
    %s134 = sadd.s32 %s133, 1
    %s135 = scalar_select %p132, %s133, %s134
    %p138 = pneg %p132
    %p139 = scmp.eq.s32.totalorder %s13, 1
    %p140 = por %p138, %p139
    %p141 = scmp.ne.s32.totalorder %s133, %s136
    %p142 = scmp.eq.s32.totalorder %s13, 0
    %p143 = por %p141, %p142
    %p144 = scmp.ne.s32.totalorder %s133, %s136
    %p145 = scmp.eq.s32.totalorder %s18, 1
    %p146 = por %p144, %p145
    %p147 = scmp.ne.s32.totalorder %s136, %s137
    %p148 = scmp.eq.s32.totalorder %s18, 0
    %p149 = por %p147, %p148
    %p150 = scmp.ne.s32.totalorder %s136, %s137
    %p151 = scmp.eq.s32.totalorder %s19, 1
    %p152 = por %p150, %p151
    %p154 = scmp.ne.s32.totalorder %s137, %s153
    %p155 = scmp.eq.s32.totalorder %s19, 0
    %p156 = por %p154, %p155
    %s157 = ssub.s32 %s13, %s20
    %p158 = scmp.eq.s32.totalorder %s157, 0
    %s160 = sadd.s32 %s159, 1
    %s161 = scalar_select %p158, %s159, %s160
    %p164 = pneg %p158
    %p165 = scmp.eq.s32.totalorder %s13, 1
    %p166 = por %p164, %p165
    %p167 = scmp.ne.s32.totalorder %s159, %s162
    %p168 = scmp.eq.s32.totalorder %s13, 0
    %p169 = por %p167, %p168
    %p170 = scmp.ne.s32.totalorder %s159, %s162
    %p171 = scmp.eq.s32.totalorder %s18, 1
    %p172 = por %p170, %p171
    %p173 = scmp.ne.s32.totalorder %s162, %s163
    %p174 = scmp.eq.s32.totalorder %s18, 0
    %p175 = por %p173, %p174
    %p176 = scmp.ne.s32.totalorder %s162, %s163
    %p177 = scmp.eq.s32.totalorder %s19, 1
    %p178 = por %p176, %p177
    %p180 = scmp.ne.s32.totalorder %s163, %s179
    %p181 = scmp.eq.s32.totalorder %s19, 0
    %p182 = por %p180, %p181
    %p183 = scmp.le.s32.totalorder 1, %s13
    %p184 = scmp.lt.s32.totalorder %s13, 3
    %p185 = pnand %p183, %p184
    %p186 = pneg %p185
    // Predicated region
    $region9: #{gabgate_pallas.1} parent=5 // pred_check
      _
    $region10: #{gabgate_pallas.1} parent=5 // pred_check_branch
      %188 = sbr.rel (%p185) target = $region12
    $region11: #{gabgate_pallas.1} parent=5 // pred_region
      %s189 = ssub.s32 %s13, 1
      // Predicated region
      $region13: #{gabgate_pallas.1} parent=11 // pred_check
        %p190 = pneg %p60
      $region14: #{gabgate_pallas.1} parent=11 // pred_check_branch
        %192 = sbr.rel (%p190) target = $region16
      $region15: #{gabgate_pallas.1} parent=11 // pred_region
        _
      $region16: #{gabgate_pallas.1} parent=11 // pred_fallthru
        _
      // Predicated region
      $region17: #{gabgate_pallas.1} parent=11 // pred_check
        %p193 = pneg %p81
      $region18: #{gabgate_pallas.1} parent=11 // pred_check_branch
        %195 = sbr.rel (%p193) target = $region20
      $region19: #{gabgate_pallas.1} parent=11 // pred_region
        _
      $region20: #{gabgate_pallas.1} parent=11 // pred_fallthru
        _
      // Predicated region
      $region21: #{gabgate_pallas.1} parent=11 // pred_check
        %p196 = pneg %p102
      $region22: #{gabgate_pallas.1} parent=11 // pred_check_branch
        %198 = sbr.rel (%p196) target = $region24
      $region23: #{gabgate_pallas.1} parent=11 // pred_region
        _
      $region24: #{gabgate_pallas.1} parent=11 // pred_fallthru
        _
      // Predicated region
      $region25: #{gabgate_pallas.1} parent=11 // pred_check
        %p199 = pneg %p123
      $region26: #{gabgate_pallas.1} parent=11 // pred_check_branch
        %201 = sbr.rel (%p199) target = $region28
      $region27: #{gabgate_pallas.1} parent=11 // pred_region
        _
      $region28: #{gabgate_pallas.1} parent=11 // pred_fallthru
        _
    $region12: #{gabgate_pallas.1} parent=5 // pred_fallthru
      _
    %p202 = scmp.lt.s32.totalorder %s13, 2
    // Predicated region
    $region29: #{gabgate_pallas.1} parent=5 // pred_check
      %p203 = pneg %p202
    $region30: #{gabgate_pallas.1} parent=5 // pred_check_branch
      %205 = sbr.rel (%p203) target = $region32
    $region31: #{gabgate_pallas.1} parent=5 // pred_region
      // Predicated region
      $region33: #{gabgate_pallas.1} parent=31 // pred_check
        %p206 = pneg %p33
      $region34: #{gabgate_pallas.1} parent=31 // pred_check_branch
        %208 = sbr.rel (%p206) target = $region36
      $region35: #{gabgate_pallas.1} parent=31 // pred_region
        %p209 = scmp.lt.s32.totalorder %s13, 1
        %s210 = scalar_select %p209, %s13, 1
        %s211 = smul.addr %s210, 2
        %s212 = smul.addr %s211, 8
        %s213 = scalar_lea.vmem %s0, %s212
      $region36: #{gabgate_pallas.1} parent=31 // pred_fallthru
        _
    $region32: #{gabgate_pallas.1} parent=5 // pred_fallthru
      _
    %p214 = scmp.le.s32.totalorder 1, %s13
    %p215 = scmp.lt.s32.totalorder %s13, 3
    %p216 = pnand %p214, %p215
    %p217 = pneg %p216
    // Predicated region
    $region37: #{gabgate_pallas.1} parent=5 // pred_check
      _
    $region38: #{gabgate_pallas.1} parent=5 // pred_check_branch
      %219 = sbr.rel (%p216) target = $region40
    $region39: #{gabgate_pallas.1} parent=5 // pred_region
      %s220 = ssub.s32 %s13, 1
      %p221 = scmp.lt.s32.totalorder %s18, 1
      %s222 = scalar_select %p221, %s18, 1
      %s223 = smul.addr %s222, 2
      %s224 = smul.addr %s223, 8
      %s225 = scalar_lea.vmem %s0, %s224
      %p226 = pneg %p39
      %p227 = pneg %p36
      %p228 = pneg %p60
      %p229 = pneg %p57
      %p230 = pneg %p81
      %p231 = pneg %p78
      %p232 = pneg %p102
      %p233 = pneg %p99
      %p234 = pneg %p123
      %p235 = pneg %p120
      %p236 = pneg %p149
      %p237 = pneg %p146
      %p238 = scmp.lt.s32.totalorder %s18, 1
      %s239 = scalar_select %p238, %s18, 1
      %s240 = smul.addr %s239, 2
      %s241 = smul.addr %s240, 8
      %s242 = scalar_lea.vmem %s5, %s241
      %p243 = pneg %p175
      %p244 = pneg %p172
      %p245 = scmp.lt.s32.totalorder %s18, 1
      %s246 = scalar_select %p245, %s18, 1
      %s247 = smul.addr %s246, 2
      %s248 = smul.addr %s247, 8
      %s249 = scalar_lea.vmem %s6, %s248
      %p250 = scmp.lt.s32.totalorder %s18, 1
      %s251 = scalar_select %p250, %s18, 1
      %s252 = smul.addr %s251, 2
      %s253 = smul.addr %s252, 8
      %s254 = scalar_lea.vmem %s0, %s253
      %p255 = scmp.lt.s32.totalorder %s18, 1
      %s256 = scalar_select %p255, %s18, 1
      %s257 = smul.addr %s256, 2
      %s258 = smul.addr %s257, 8
      %s259 = scalar_lea.vmem %s5, %s258
      %p260 = scmp.lt.s32.totalorder %s18, 1
      %s261 = scalar_select %p260, %s18, 1
      %s262 = smul.addr %s261, 2
      %s263 = smul.addr %s262, 8
      %s264 = scalar_lea.vmem %s6, %s263
      %v265 = vld [vmem:[%s254] sm:$0xff]
      %v266 = vld [vmem:[%s254 + $0x8] sm:$0xff]
      %v267 = vadd.f32 %v265, %v266
      %268 = vadd.xlane.f32.xlu0 %v267
      %v269 = vpop.xlane.xlu0 %268
      %v270 = vmul.f32 %v269, 0.00390625
      %v271 = vld [vmem:[%s1] sm:$0xff]
      %v272 = vmul.f32 %v271, %v270
      %vm273 = vcmask 15360
      %v274 = vsel %vm273, %v272, 0.0
      %v275 = vrot.slane %v274, 4
      %v276 = vadd.f32 %v274, %v275
      %v277 = vrot.slane %v276, 2
      %v278 = vadd.f32 %v276, %v277
      %v279 = vrot.slane %v278, 1
      %v280 = vadd.f32 %v278, %v279
      %v281 = vld [vmem:[%s2] sm:$0x1]
      %v282 = vadd.f32 %v280, %v281
      %v283 = vmax.f32 %v282, 0.0
      %v284 = vld [vmem:[%s3] sm:$0xff]
      %v285 = vperm.slane %v283, 0
      %v286 = vmul.f32 %v284, %v285
      %v287 = vsel %vm273, %v286, 0.0
      %288 = vadd.xlane.f32.xlu0 %v287
      %v289 = vpop.xlane.xlu0 %288
      %v290 = vld [vmem:[%s4] sm:$0xff]
      %v291 = vadd.f32 %v289, %v290
      %v292 = vxor.u32 %v291, 2147483648
      %v293 = vmul.f32 %v292, 1.442695
      %v294 = vpow.pop %v293
      %v295 = vadd.f32 %v294, 1.0
      %v296 = vrcp.pop %v295
      %v297 = vmul.f32 %v295, %v296
      %v298 = vsub.f32 1.0, %v297
      %v299 = vmul.f32 %v296, %v298
      %v300 = vadd.f32 %v296, %v299
      %vm301 = vweird.f32 %v295
      %vm302 = vweird.f32 %v296
      %vm303 = vmor %vm301, %vm302
      %v304 = vsel %vm303, %v296, %v300
      %v305 = vand.u32 2147483647, %v295
      %vm306 = vcmp.eq.f32.partialorder %v305, 8.507059e+37
      %v307 = vand.u32 %v295, 2147483648
      %v308 = vor.u32 1.1754944e-38, %v307
      %v309 = vsel %vm306, %v308, %v304
      %v310 = vmul.f32 1.0, %v309
      %312 = vset.pattern.permute.xlu0 0
      %313 = vperm.xlu0 %312, %v310
      %v314 = vpop.permute.xlu0 %313
      %v316 = vmul.f32 %v265, %v314
      %v317 = vmul.f32 %v266, %v314
      %318 = vst [vmem:[%s259] sm:$0xff] %v316
      %319 = vst [vmem:[%s259 + $0x8] sm:$0xff] %v317
      %v320 = vsub.f32 %v265, %v316
      %v321 = vsub.f32 %v266, %v317
      %322 = vst [vmem:[%s264] sm:$0xff] %v320
      %323 = vst [vmem:[%s264 + $0x8] sm:$0xff] %v321
      %p324 = scmp.lt.s32.totalorder %s18, 1
      %s325 = scalar_select %p324, %s18, 1
      %s326 = smul.addr %s325, 2
      %s327 = smul.addr %s326, 8
      %s328 = scalar_lea.vmem %s5, %s327
      %p329 = scmp.lt.s32.totalorder %s18, 1
      %s330 = scalar_select %p329, %s18, 1
      %s331 = smul.addr %s330, 2
      %s332 = smul.addr %s331, 8
      %s333 = scalar_lea.vmem %s6, %s332
      // Predicated region
      $region41: #{gabgate_pallas.1} parent=39 // pred_check
        %p334 = pneg %p146
      $region42: #{gabgate_pallas.1} parent=39 // pred_check_branch
        %336 = sbr.rel (%p334) target = $region44
      $region43: #{gabgate_pallas.1} parent=39 // pred_region
        _
      $region44: #{gabgate_pallas.1} parent=39 // pred_fallthru
        _
      // Predicated region
      $region45: #{gabgate_pallas.1} parent=39 // pred_check
        %p337 = pneg %p172
      $region46: #{gabgate_pallas.1} parent=39 // pred_check_branch
        %339 = sbr.rel (%p337) target = $region48
      $region47: #{gabgate_pallas.1} parent=39 // pred_region
        _
      $region48: #{gabgate_pallas.1} parent=39 // pred_fallthru
        _
    $region40: #{gabgate_pallas.1} parent=5 // pred_fallthru
      _
    %p340 = scmp.le.s32.totalorder 2, %s13
    // Predicated region
    $region49: #{gabgate_pallas.1} parent=5 // pred_check
      %p341 = pneg %p340
    $region50: #{gabgate_pallas.1} parent=5 // pred_check_branch
      %343 = sbr.rel (%p341) target = $region52
    $region51: #{gabgate_pallas.1} parent=5 // pred_region
      %s344 = ssub.s32 %s13, 2
      // Predicated region
      $region53: #{gabgate_pallas.1} parent=51 // pred_check
        %p345 = pneg %p152
      $region54: #{gabgate_pallas.1} parent=51 // pred_check_branch
        %347 = sbr.rel (%p345) target = $region56
      $region55: #{gabgate_pallas.1} parent=51 // pred_region
        %p348 = scmp.lt.s32.totalorder %s19, 1
        %s349 = scalar_select %p348, %s19, 1
        %s350 = smul.addr %s349, 2
        %s351 = smul.addr %s350, 8
        %s352 = scalar_lea.vmem %s5, %s351
      $region56: #{gabgate_pallas.1} parent=51 // pred_fallthru
        _
      // Predicated region
      $region57: #{gabgate_pallas.1} parent=51 // pred_check
        %p353 = pneg %p178
      $region58: #{gabgate_pallas.1} parent=51 // pred_check_branch
        %355 = sbr.rel (%p353) target = $region60
      $region59: #{gabgate_pallas.1} parent=51 // pred_region
        %p356 = scmp.lt.s32.totalorder %s19, 1
        %s357 = scalar_select %p356, %s19, 1
        %s358 = smul.addr %s357, 2
        %s359 = smul.addr %s358, 8
        %s360 = scalar_lea.vmem %s6, %s359
      $region60: #{gabgate_pallas.1} parent=51 // pred_fallthru
        _
    $region52: #{gabgate_pallas.1} parent=5 // pred_fallthru
      _
  $region6: #{gabgate_pallas.1} parent=0 // loop_footer
    %s17 = sadd.s32 1, %s13
  $region7: #{gabgate_pallas.1} parent=0 // loop_footer_branch
    %12 = sbr.rel target = $region3
  $region8: #{gabgate_pallas.1} parent=0 // loop_exit
    _

</llo_original>
